<compile_context>
chip_gen: v7x
topology: tpu7x:2x2x1
jax: 0.10.0
libtpu: 0.0.40
codegen_flags: <defaults>
</compile_context>

<pallas_src>
import functools

import jax
import jax.numpy as jnp
from jax.experimental import pallas as pl
from jax.experimental.pallas import tpu as pltpu  # noqa: F401  (memory spaces)


def actor_kernel(x_ref, eps_ref, w1_ref, b1_ref, wh_ref, bh_ref, out_ref, *, out_dim):
    """Fused Actor forward.

    Output slab layout (lane-packed): [ action | mu | std ], each out_dim wide.
    """
    x = x_ref[...]

    # hidden1 + ReLU (hidden=128 -> exactly one systolic pass, no K split).
    h = jnp.dot(x, w1_ref[...], preferred_element_type=jnp.float32) + b1_ref[...]
    h = jnp.maximum(h, 0.0)

    # Fused mu / log_std heads: single matmul of lane width 2*out_dim.
    heads = jnp.dot(h, wh_ref[...], preferred_element_type=jnp.float32) + bh_ref[...]
    mu_lin = heads[:, :out_dim]
    ls_lin = heads[:, out_dim:]

    mu = jnp.tanh(mu_lin) * 2.0
    # std = exp(softplus(x)) == 1 + exp(x)  (exact; one transcendental).
    std = 1.0 + jnp.exp(ls_lin)

    # dist = Normal(mu, std); action = dist.sample() (reparameterized,
    # eps ~ N(0,1) supplied by the wrapper).
    action = mu + std * eps_ref[...]

    # Single lane-packed store of all results.
    out_ref[...] = jnp.concatenate([action, mu, std], axis=1)


@jax.jit
def actor_forward(state, params, key):
    """Run the Actor forward pass in one Pallas kernel.

    state:  (B, in_dim) float32
    params: (w1, b1, wmu, bmu, wls, bls); weights stored as (in_features, out_features)
    key:    jax.random key used for dist.sample() noise
    Returns (action, mu, std, eps), each (B, out_dim) float32.
    """
    w1, b1, wmu, bmu, wls, bls = params
    B, in_dim = state.shape
    hidden = w1.shape[1]
    out_dim = wmu.shape[1]

    # Layout plumbing (fuses under jit): fold both heads into one matmul,
    # present biases as (1, n) rows for clean broadcasting.
    b1_2d = b1.reshape(1, hidden)
    w_heads = jnp.concatenate([wmu, wls], axis=1)                     # (hidden, 2*out_dim)
    b_heads = jnp.concatenate([bmu, bls], axis=0).reshape(1, 2 * out_dim)

    # eps ~ N(0, 1) for the reparameterized Normal(mu, std).sample().
    eps = jax.random.normal(key, (B, out_dim), jnp.float32)

    # Everything fits comfortably in one VMEM tile -> gridless, full-array blocks.
    def full_spec(shape):
        return pl.BlockSpec(shape, lambda: (0,) * len(shape))

    out = pl.pallas_call(
        functools.partial(actor_kernel, out_dim=out_dim),
        out_shape=jax.ShapeDtypeStruct((B, 3 * out_dim), jnp.float32),
        in_specs=[
            full_spec((B, in_dim)),
            full_spec((B, out_dim)),
            full_spec((in_dim, hidden)),
            full_spec((1, hidden)),
            full_spec((hidden, 2 * out_dim)),
            full_spec((1, 2 * out_dim)),
        ],
        out_specs=full_spec((B, 3 * out_dim)),
    )(state, eps, w1, b1_2d, w_heads, b_heads)

    action = out[:, 0 * out_dim:1 * out_dim]
    mu = out[:, 1 * out_dim:2 * out_dim]
    std = out[:, 2 * out_dim:3 * out_dim]
    return action, mu, std, eps


def init_actor_params(key, in_dim, out_dim, hidden=128, init_w=0.003):
    """Deterministic parameter init mimicking the PyTorch module.

    hidden1: PyTorch default Linear init ~ U(-1/sqrt(in_dim), 1/sqrt(in_dim)).
    mu_layer / log_std_layer: initialize_uniformly -> U(-init_w, init_w).
    Weights stored as (in_features, out_features).
    """
    k1, k2, k3, k4, k5, k6 = jax.random.split(key, 6)
    bound1 = 1.0 / jnp.sqrt(jnp.float32(in_dim))
    w1 = jax.random.uniform(k1, (in_dim, hidden), jnp.float32, -bound1, bound1)
    b1 = jax.random.uniform(k2, (hidden,), jnp.float32, -bound1, bound1)
    wmu = jax.random.uniform(k3, (hidden, out_dim), jnp.float32, -init_w, init_w)
    bmu = jax.random.uniform(k4, (out_dim,), jnp.float32, -init_w, init_w)
    wls = jax.random.uniform(k5, (hidden, out_dim), jnp.float32, -init_w, init_w)
    bls = jax.random.uniform(k6, (out_dim,), jnp.float32, -init_w, init_w)
    return (w1, b1, wmu, bmu, wls, bls)


if __name__ == "__main__":
    B, IN_DIM, OUT_DIM = 8, 32, 8

    key = jax.random.PRNGKey(0)
    k_params, k_state, k_sample = jax.random.split(key, 3)

    params = init_actor_params(k_params, IN_DIM, OUT_DIM)
    state = jax.random.normal(k_state, (B, IN_DIM), jnp.float32)

    action, mu, std, eps = actor_forward(state, params, k_sample)
    jax.block_until_ready((action, mu, std, eps))

    # Pure-JAX reference: mu/std are deterministic; action is checked against
    # the same eps via the reparameterization identity.
    w1, b1, wmu, bmu, wls, bls = params
    h_ref = jnp.maximum(state @ w1 + b1, 0.0)
    mu_ref = jnp.tanh(h_ref @ wmu + bmu) * 2.0
    std_ref = jnp.exp(jax.nn.softplus(h_ref @ wls + bls))

    assert jnp.allclose(mu, mu_ref, atol=1e-5), "mu mismatch"
    assert jnp.allclose(std, std_ref, atol=1e-5), "std mismatch"
    assert jnp.allclose(action, mu_ref + std_ref * eps, atol=1e-5), "action mismatch"
    assert bool(jnp.all(jnp.isfinite(action))), "action not finite"

    print("KERNEL_OK")
</pallas_src>

<mosaic_0001>
module attributes {stable_mosaic.version = 11 : i64} {
  func.func @actor_kernel(%arg0: memref<8x32xf32, #tpu.memory_space<vmem>>, %arg1: memref<8x8xf32, #tpu.memory_space<vmem>>, %arg2: memref<32x128xf32, #tpu.memory_space<vmem>>, %arg3: memref<1x128xf32, #tpu.memory_space<vmem>>, %arg4: memref<128x16xf32, #tpu.memory_space<vmem>>, %arg5: memref<1x16xf32, #tpu.memory_space<vmem>>, %arg6: memref<8x24xf32, #tpu.memory_space<vmem>>) attributes {dimension_semantics = [], scalar_prefetch = 0 : i64, scratch_operands = 0 : i64, tpu.core_type = #tpu.core_type<tc>} {
    %c0 = arith.constant 0 : index
    %c0_0 = arith.constant 0 : index
    %0 = vector.load %arg0[%c0, %c0_0] : memref<8x32xf32, #tpu.memory_space<vmem>>, vector<8x32xf32>
    %c0_1 = arith.constant 0 : index
    %c0_2 = arith.constant 0 : index
    %1 = vector.load %arg2[%c0_1, %c0_2] : memref<32x128xf32, #tpu.memory_space<vmem>>, vector<32x128xf32>
    %cst = arith.constant dense<0.000000e+00> : vector<8x128xf32>
    %2 = tpu.matmul %0, %1, %cst {dimension_numbers = #tpu.dot_dimension_numbers<[1], [0], [0], [1], [0, 0, 1, 1], [], []>} : vector<8x32xf32>, vector<32x128xf32>, vector<8x128xf32> -> vector<8x128xf32>
    %c0_3 = arith.constant 0 : index
    %c0_4 = arith.constant 0 : index
    %3 = vector.load %arg3[%c0_3, %c0_4] : memref<1x128xf32, #tpu.memory_space<vmem>>, vector<1x128xf32>
    %4 = vector.broadcast %3 : vector<1x128xf32> to vector<8x128xf32>
    %5 = arith.addf %2, %4 : vector<8x128xf32>
    %cst_5 = arith.constant 0.000000e+00 : f32
    %6 = vector.broadcast %cst_5 : f32 to vector<8x128xf32>
    %7 = arith.maximumf %5, %6 : vector<8x128xf32>
    %c0_6 = arith.constant 0 : index
    %c0_7 = arith.constant 0 : index
    %8 = vector.load %arg4[%c0_6, %c0_7] : memref<128x16xf32, #tpu.memory_space<vmem>>, vector<128x16xf32>
    %cst_8 = arith.constant dense<0.000000e+00> : vector<8x16xf32>
    %9 = tpu.matmul %7, %8, %cst_8 {dimension_numbers = #tpu.dot_dimension_numbers<[1], [0], [0], [1], [0, 0, 1, 1], [], []>} : vector<8x128xf32>, vector<128x16xf32>, vector<8x16xf32> -> vector<8x16xf32>
    %c0_9 = arith.constant 0 : index
    %c0_10 = arith.constant 0 : index
    %10 = vector.load %arg5[%c0_9, %c0_10] : memref<1x16xf32, #tpu.memory_space<vmem>>, vector<1x16xf32>
    %11 = vector.broadcast %10 : vector<1x16xf32> to vector<8x16xf32>
    %12 = arith.addf %9, %11 : vector<8x16xf32>
    %13 = vector.extract_strided_slice %12 {offsets = [0, 0], sizes = [8, 8], strides = [1, 1]} : vector<8x16xf32> to vector<8x8xf32>
    %14 = vector.extract_strided_slice %12 {offsets = [0, 8], sizes = [8, 8], strides = [1, 1]} : vector<8x16xf32> to vector<8x8xf32>
    %15 = math.tanh %13 : vector<8x8xf32>
    %cst_11 = arith.constant 2.000000e+00 : f32
    %16 = vector.broadcast %cst_11 : f32 to vector<8x8xf32>
    %17 = arith.mulf %15, %16 : vector<8x8xf32>
    %18 = math.exp %14 : vector<8x8xf32>
    %cst_12 = arith.constant 1.000000e+00 : f32
    %19 = vector.broadcast %cst_12 : f32 to vector<8x8xf32>
    %20 = arith.addf %19, %18 : vector<8x8xf32>
    %c0_13 = arith.constant 0 : index
    %c0_14 = arith.constant 0 : index
    %21 = vector.load %arg1[%c0_13, %c0_14] : memref<8x8xf32, #tpu.memory_space<vmem>>, vector<8x8xf32>
    %22 = arith.mulf %20, %21 : vector<8x8xf32>
    %23 = arith.addf %17, %22 : vector<8x8xf32>
    %24 = tpu.concatenate %23, %17, %20 in 1 : vector<8x8xf32>, vector<8x8xf32>, vector<8x8xf32> -> vector<8x24xf32>
    %c0_15 = arith.constant 0 : index
    %c0_16 = arith.constant 0 : index
    %25 = vector.load %arg6[%c0_15, %c0_16] : memref<8x24xf32, #tpu.memory_space<vmem>>, vector<8x24xf32>
    tpu.vector_store %arg6[%c0_15, %c0_16], %24 {strides = array<i32>} : memref<8x24xf32, #tpu.memory_space<vmem>>, vector<8x24xf32>,
    return
  }
}

</mosaic_0001>

<llo_original>
// kernel: actor_forward.1
$region0: #{actor_forward.1}
  #allocation0 [shape = 'u32[]', space=smem, size = 0x4, offset = 0x4, fixed_abs, tag = 'smem constant byte address 0x4 - core index']
  #allocation1 [shape = 'u32[144,128]{1,0:T(1,128)}', space=vmem, size = 0x12000, scoped, tag = 'internal scratch']
  %s0 = inlined_call_operand.vmem [shape: f32[8,32], index: 0, kind: input, shape index: {}]
  %s1 = inlined_call_operand.vmem [shape: f32[8,8], index: 1, kind: input, shape index: {}]
  %s2 = inlined_call_operand.vmem [shape: f32[32,128], index: 2, kind: input, shape index: {}]
  %s3 = inlined_call_operand.vmem [shape: f32[1,128], index: 3, kind: input, shape index: {}]
  %s4 = inlined_call_operand.vmem [shape: f32[128,16], index: 4, kind: input, shape index: {}]
  %s5 = inlined_call_operand.vmem [shape: f32[1,16], index: 5, kind: input, shape index: {}]
  %s6 = inlined_call_operand.vmem [shape: f32[8,24], index: 6, kind: output, shape index: {}]
  %s7 = sld [smem:[#allocation0]]
  $region34: #{actor_forward.1} parent=0
    _
  %s9 = ssub.s32 1, %s7
  %s10 = scalar_select 0, %s9, %s7
  // Predicated region
  $region2: #{actor_forward.1} parent=0 // pred_check
    _
  $region3: #{actor_forward.1} parent=0 // pred_check_branch
    %12 = sbr.rel (0) target = $region5
  $region4: #{actor_forward.1} parent=0 // pred_region
    _
  $region5: #{actor_forward.1} parent=0 // pred_fallthru
    _
  // Predicated region
  $region6: #{actor_forward.1} parent=0 // pred_check
    _
  $region7: #{actor_forward.1} parent=0 // pred_check_branch
    %14 = sbr.rel (0) target = $region9
  $region8: #{actor_forward.1} parent=0 // pred_region
    _
  $region9: #{actor_forward.1} parent=0 // pred_fallthru
    _
  // Predicated region
  $region10: #{actor_forward.1} parent=0 // pred_check
    _
  $region11: #{actor_forward.1} parent=0 // pred_check_branch
    %16 = sbr.rel (0) target = $region13
  $region12: #{actor_forward.1} parent=0 // pred_region
    _
  $region13: #{actor_forward.1} parent=0 // pred_fallthru
    _
  // Predicated region
  $region14: #{actor_forward.1} parent=0 // pred_check
    _
  $region15: #{actor_forward.1} parent=0 // pred_check_branch
    %18 = sbr.rel (0) target = $region17
  $region16: #{actor_forward.1} parent=0 // pred_region
    _
  $region17: #{actor_forward.1} parent=0 // pred_fallthru
    _
  // Predicated region
  $region18: #{actor_forward.1} parent=0 // pred_check
    _
  $region19: #{actor_forward.1} parent=0 // pred_check_branch
    %20 = sbr.rel (0) target = $region21
  $region20: #{actor_forward.1} parent=0 // pred_region
    _
  $region21: #{actor_forward.1} parent=0 // pred_fallthru
    _
  // Predicated region
  $region22: #{actor_forward.1} parent=0 // pred_check
    _
  $region23: #{actor_forward.1} parent=0 // pred_check_branch
    %22 = sbr.rel (0) target = $region25
  $region24: #{actor_forward.1} parent=0 // pred_region
    _
  $region25: #{actor_forward.1} parent=0 // pred_fallthru
    _
  %v23 = vld [vmem:[%s0] sm:$0xff]
  %v24 = vld [vmem:[%s2] sm:$0xff]
  %v25 = vld [vmem:[%s2 + $0x8] sm:$0xff]
  %v26 = vld [vmem:[%s2 + $0x10] sm:$0xff]
  %v27 = vld [vmem:[%s2 + $0x18] sm:$0xff]
  %v28 = vld [vmem:[%s3] sm:$0x1]
  %v30 = vlaneseq
  %v31 = vshrl.u32 %v30, 7
  %v32 = vsub.s32 0, %v31
  %v33 = vrot.slane %v28, %v32
  %vm35 = vcmask 261120
  %v37 = vsel %vm35, %v23, 0
  %39 = vmatprep.subr.mxu0 0.0
  %40 = vmatpush1.msra.mxu0 %v24
  %41 = vmatprep.subr.mxu0 0.0
  %42 = vmatpush1.msra.mxu0 %v25
  %43 = vmatprep.subr.mxu0 0.0
  %44 = vmatpush1.msra.mxu0 %v26
  %45 = vmatprep.subr.mxu0 0.0
  %46 = vmatpush1.msra.mxu0 %v27
  %47 = vmatprep.subr.mxu0 0.0
  %48 = vmatpush1.msra.mxu0 0.0
  %49 = vmatprep.subr.mxu0 0.0
  %50 = vmatpush1.msra.mxu0 0.0
  %51 = vmatprep.subr.mxu0 0.0
  %52 = vmatpush1.msra.mxu0 0.0
  %53 = vmatprep.subr.mxu0 0.0
  %54 = vmatpush1.msra.mxu0 0.0
  %55 = vmatprep.subr.mxu0 0.0
  %56 = vmatpush1.msra.mxu0 0.0
  %57 = vmatprep.subr.mxu0 0.0
  %58 = vmatpush1.msra.mxu0 0.0
  %59 = vmatprep.subr.mxu0 0.0
  %60 = vmatpush1.msra.mxu0 0.0
  %61 = vmatprep.subr.mxu0 0.0
  %62 = vmatpush1.msra.mxu0 0.0
  %63 = vmatprep.subr.mxu0 0.0
  %64 = vmatpush1.msra.mxu0 0.0
  %65 = vmatprep.subr.mxu0 0.0
  %66 = vmatpush1.msra.mxu0 0.0
  %67 = vmatprep.subr.mxu0 0.0
  %68 = vmatpush1.msra.mxu0 0.0
  %69 = vmatprep.subr.mxu0 0.0
  %70 = vmatpush1.msra.mxu0 0.0
  %71 = vmatprep.subr.mxu0 0.0
  %72 = vmatpush1.msra.mxu0 0.0
  %73 = vmatprep.subr.mxu0 0.0
  %74 = vmatpush1.msra.mxu0 0.0
  %75 = vmatprep.subr.mxu0 0.0
  %76 = vmatpush1.msra.mxu0 0.0
  %77 = vmatprep.subr.mxu0 0.0
  %78 = vmatpush1.msra.mxu0 0.0
  %79 = vmatprep.subr.mxu0 0.0
  %80 = vmatpush1.msra.mxu0 0.0
  %81 = vmatprep.subr.mxu0 0.0
  %82 = vmatpush1.msra.mxu0 0.0
  %83 = vmatprep.subr.mxu0 0.0
  %84 = vmatpush1.msra.mxu0 0.0
  %85 = vmatprep.subr.mxu0 0.0
  %86 = vmatpush1.msra.mxu0 0.0
  %87 = vmatprep.subr.mxu0 0.0
  %88 = vmatpush1.msra.mxu0 0.0
  %89 = vmatprep.subr.mxu0 0.0
  %90 = vmatpush1.msra.mxu0 0.0
  %91 = vmatprep.subr.mxu0 0.0
  %92 = vmatpush1.msra.mxu0 0.0
  %93 = vmatprep.subr.mxu0 0.0
  %94 = vmatpush1.msra.mxu0 0.0
  %95 = vmatprep.subr.mxu0 0.0
  %96 = vmatpush1.msra.mxu0 0.0
  %97 = vmatprep.subr.mxu0 0.0
  %98 = vmatpush1.msra.mxu0 0.0
  %99 = vmatprep.subr.mxu0 0.0
  %100 = vmatpush1.msra.mxu0 0.0
  %101 = vmatprep.subr.mxu0 0.0
  %102 = vmatpush1.msra.mxu0 0.0
  %103 = vmatprep.mubr.f32.mxu0 0.0
  %104 = vmatmul.mubr.f32.gmra.mrb[0].mxu0 %v37
  %v105 = vpop.f32.mrb[0].mxu0
  %v106 = vadd.f32 %v33, %v105
  %v107 = vpop.f32.mrb[0].mxu0
  %108 = vdwg.mxu0
  %v109 = vmax.f32 %v106, 0.0
  %v110 = vld [vmem:[%s4] sm:$0xff]
  %v111 = vld [vmem:[%s4 + $0x8] sm:$0xff]
  %v112 = vld [vmem:[%s4 + $0x10] sm:$0xff]
  %v113 = vld [vmem:[%s4 + $0x18] sm:$0xff]
  %v114 = vld [vmem:[%s4 + $0x20] sm:$0xff]
  %v115 = vld [vmem:[%s4 + $0x28] sm:$0xff]
  %v116 = vld [vmem:[%s4 + $0x30] sm:$0xff]
  %v117 = vld [vmem:[%s4 + $0x38] sm:$0xff]
  %v118 = vld [vmem:[%s4 + $0x40] sm:$0xff]
  %v119 = vld [vmem:[%s4 + $0x48] sm:$0xff]
  %v120 = vld [vmem:[%s4 + $0x50] sm:$0xff]
  %v121 = vld [vmem:[%s4 + $0x58] sm:$0xff]
  %v122 = vld [vmem:[%s4 + $0x60] sm:$0xff]
  %v123 = vld [vmem:[%s4 + $0x68] sm:$0xff]
  %v124 = vld [vmem:[%s4 + $0x70] sm:$0xff]
  %v125 = vld [vmem:[%s4 + $0x78] sm:$0xff]
  %v126 = vld [vmem:[%s5] sm:$0x1]
  %v128 = vlaneseq
  %v129 = vshrl.u32 %v128, 7
  %v130 = vsub.s32 0, %v129
  %v131 = vrot.slane %v126, %v130
  %133 = vmatprep.subr.mxu0 0.0
  %134 = vmatpush1.msra.mxu0 %v110
  %135 = vmatprep.subr.mxu0 0.0
  %136 = vmatpush1.msra.mxu0 %v111
  %137 = vmatprep.subr.mxu0 0.0
  %138 = vmatpush1.msra.mxu0 %v112
  %139 = vmatprep.subr.mxu0 0.0
  %140 = vmatpush1.msra.mxu0 %v113
  %141 = vmatprep.subr.mxu0 0.0
  %142 = vmatpush1.msra.mxu0 %v114
  %143 = vmatprep.subr.mxu0 0.0
  %144 = vmatpush1.msra.mxu0 %v115
  %145 = vmatprep.subr.mxu0 0.0
  %146 = vmatpush1.msra.mxu0 %v116
  %147 = vmatprep.subr.mxu0 0.0
  %148 = vmatpush1.msra.mxu0 %v117
  %149 = vmatprep.subr.mxu0 0.0
  %150 = vmatpush1.msra.mxu0 %v118
  %151 = vmatprep.subr.mxu0 0.0
  %152 = vmatpush1.msra.mxu0 %v119
  %153 = vmatprep.subr.mxu0 0.0
  %154 = vmatpush1.msra.mxu0 %v120
  %155 = vmatprep.subr.mxu0 0.0
  %156 = vmatpush1.msra.mxu0 %v121
  %157 = vmatprep.subr.mxu0 0.0
  %158 = vmatpush1.msra.mxu0 %v122
  %159 = vmatprep.subr.mxu0 0.0
  %160 = vmatpush1.msra.mxu0 %v123
  %161 = vmatprep.subr.mxu0 0.0
  %162 = vmatpush1.msra.mxu0 %v124
  %163 = vmatprep.subr.mxu0 0.0
  %164 = vmatpush1.msra.mxu0 %v125
  %165 = vmatprep.subr.mxu0 0.0
  %166 = vmatpush1.msra.mxu0 0.0
  %167 = vmatprep.subr.mxu0 0.0
  %168 = vmatpush1.msra.mxu0 0.0
  %169 = vmatprep.subr.mxu0 0.0
  %170 = vmatpush1.msra.mxu0 0.0
  %171 = vmatprep.subr.mxu0 0.0
  %172 = vmatpush1.msra.mxu0 0.0
  %173 = vmatprep.subr.mxu0 0.0
  %174 = vmatpush1.msra.mxu0 0.0
  %175 = vmatprep.subr.mxu0 0.0
  %176 = vmatpush1.msra.mxu0 0.0
  %177 = vmatprep.subr.mxu0 0.0
  %178 = vmatpush1.msra.mxu0 0.0
  %179 = vmatprep.subr.mxu0 0.0
  %180 = vmatpush1.msra.mxu0 0.0
  %181 = vmatprep.subr.mxu0 0.0
  %182 = vmatpush1.msra.mxu0 0.0
  %183 = vmatprep.subr.mxu0 0.0
  %184 = vmatpush1.msra.mxu0 0.0
  %185 = vmatprep.subr.mxu0 0.0
  %186 = vmatpush1.msra.mxu0 0.0
  %187 = vmatprep.subr.mxu0 0.0
  %188 = vmatpush1.msra.mxu0 0.0
  %189 = vmatprep.subr.mxu0 0.0
  %190 = vmatpush1.msra.mxu0 0.0
  %191 = vmatprep.subr.mxu0 0.0
  %192 = vmatpush1.msra.mxu0 0.0
  %193 = vmatprep.subr.mxu0 0.0
  %194 = vmatpush1.msra.mxu0 0.0
  %195 = vmatprep.subr.mxu0 0.0
  %196 = vmatpush1.msra.mxu0 0.0
  %197 = vmatprep.mubr.f32.mxu0 0.0
  %198 = vmatmul.mubr.f32.gmra.mrb[0].mxu0 %v109
  %v199 = vpop.f32.mrb[0].mxu0
  %v200 = vadd.f32 %v131, %v199
  %v201 = vpop.f32.mrb[0].mxu0
  %202 = vdwg.mxu0
  %v203 = vtanh.pop %v200
  %v204 = vmul.f32 %v203, 2.0
  %v205 = vmul.f32 %v200, 1.442695
  %v206 = vpow.pop %v205
  %v207 = vadd.f32 %v206, 1.0
  %v208 = vld [vmem:[%s1] sm:$0xff]
  %210 = vrot.lane.b32.xlu0 %v208, 8
  %v211 = vpop.permute.xlu0 %210
  %v213 = vmul.f32 %v207, %v211
  %215 = vrot.lane.b32.xlu0 %v213, 120
  %v216 = vpop.permute.xlu0 %215
  %v218 = vadd.f32 %v204, %v216
  %220 = vrot.lane.b32.xlu0 %v204, 8
  %v221 = vpop.permute.xlu0 %220
  %224 = vrot.lane.b32.xlu0 %v207, 8
  %v225 = vpop.permute.xlu0 %224
  %vm227 = vcmask 64512
  %v228 = vsel %vm227, %v218, %v221
  %vm229 = vcmask 130048
  %v230 = vsel %vm229, %v228, %v225
  %vm231 = vcmask 195584
  %232 = vst.msk [vmem:[%s6] sm:$0xff] %vm231, %v230
  // Predicated region
  $region26: #{actor_forward.1} parent=0 // pred_check
    _
  $region27: #{actor_forward.1} parent=0 // pred_check_branch
    %234 = sbr.rel (0) target = $region29
  $region28: #{actor_forward.1} parent=0 // pred_region
    _
  $region29: #{actor_forward.1} parent=0 // pred_fallthru
    _
  // Predicated region
  $region30: #{actor_forward.1} parent=0 // pred_check
    _
  $region31: #{actor_forward.1} parent=0 // pred_check_branch
    %236 = sbr.rel (0) target = $region33
  $region32: #{actor_forward.1} parent=0 // pred_region
    _
  $region33: #{actor_forward.1} parent=0 // pred_fallthru
    _

</llo_original>
